<compile_context>
chip_gen: v7x
topology: tpu7x:2x2x1
jax: 0.10.0
libtpu: 0.0.40
codegen_flags: <defaults>
</compile_context>

<pallas_src>
import functools

import jax
import jax.numpy as jnp
from jax.experimental import pallas as pl
from jax.experimental.pallas import tpu as pltpu


def _label_smoothing_kernel(logits_ref, target_ref, loss_ref, cnt_ref,
                            m_sc, l_sc, sumx_sc, xtgt_sc, *,
                            smoothing, n_classes, padding_index, row_tile,
                            vocab_chunk, total_rows, ragged_vocab):
    i = pl.program_id(0)        # row-tile index  ("parallel")
    j = pl.program_id(1)        # vocab-chunk index ("arbitrary" reduction)
    nv = pl.num_programs(1)

    @pl.when(j == 0)
    def _():
        m_sc[...] = jnp.full_like(m_sc, -jnp.inf)
        l_sc[...] = jnp.zeros_like(l_sc)
        sumx_sc[...] = jnp.zeros_like(sumx_sc)
        xtgt_sc[...] = jnp.zeros_like(xtgt_sc)

    x_nat = logits_ref[...]                 # (TM, VC) native dtype (bf16 OK)
    tgt = target_ref[...]                   # (TM, 1) int32

    # Global vocab-column index of every lane in this chunk.
    col = j * vocab_chunk + jax.lax.broadcasted_iota(jnp.int32, x_nat.shape, 1)

    if ragged_vocab:
        # The last vocab chunk DMAs past V; neutralize garbage columns before
        # any reduction (where-select so NaN/Inf garbage cannot leak).
        col_ok = col < n_classes
        x_nat = jnp.where(col_ok, x_nat, jnp.array(-jnp.inf, x_nat.dtype))

    # Row max on the native tile (packed bf16 VALU on v6e/v7x); exact in f32.
    chunk_max = jnp.max(x_nat, axis=-1, keepdims=True).astype(jnp.float32)

    x = x_nat.astype(jnp.float32)           # single f32 upcast per chunk

    # Online log-sum-exp over vocab chunks (flash-style rescaling).
    m_new = jnp.maximum(m_sc[...], chunk_max)
    alpha = jnp.exp(m_sc[...] - m_new)
    p = jnp.exp(x - m_new)                  # masked cols: x = -inf -> p = 0
    l_sc[...] = alpha * l_sc[...] + jnp.sum(p, axis=-1, keepdims=True)

    if ragged_vocab:
        x_sum_src = jnp.where(col_ok, x, 0.0)
    else:
        x_sum_src = x
    # NOTE: sum_v(x) is accumulated directly; for very large V the final
    # sum_x - V*(m + lse) cancellation can cost a few ulps vs. the reference.
    sumx_sc[...] += jnp.sum(x_sum_src, axis=-1, keepdims=True)
    xtgt_sc[...] += jnp.sum(jnp.where(col == tgt, x, 0.0),
                            axis=-1, keepdims=True)
    m_sc[...] = m_new

    @pl.when(j == nv - 1)
    def _():
        norm = m_sc[...] + jnp.log(l_sc[...])          # m + lse,        (TM,1)
        sum_logp = sumx_sc[...] - n_classes * norm     # sum_v logp,     (TM,1)
        logp_tgt = xtgt_sc[...] - norm                 # logp[tgt],      (TM,1)

        smooth_val = smoothing / (n_classes - 1)
        loss_row = -(smooth_val * sum_logp
                     + (1.0 - smoothing - smooth_val) * logp_tgt)

        # Mask rows past the logical end (ragged last row tile) and padding.
        row0 = i * row_tile
        local_row = jax.lax.broadcasted_iota(jnp.int32, (row_tile, 1), 0)
        in_range = (row0 + local_row) < total_rows
        if padding_index is not None:
            valid = jnp.logical_and(in_range, tgt != padding_index)
        else:
            valid = in_range

        loss_row = jnp.where(valid, loss_row, 0.0)
        # Finish the per-tile reduction in-kernel (XLU cross-sublane reduce),
        # so only two scalars per row tile go back to HBM.
        loss_ref[...] = jnp.sum(loss_row, axis=0, keepdims=True)
        cnt_ref[...] = jnp.sum(valid.astype(jnp.float32), axis=0, keepdims=True)


def _choose_tiles(rows, vocab, itemsize, *, max_row_tile=256,
                  stream_budget_bytes=20 * 1024 * 1024):
    """Pick (row_tile, vocab_chunk) so the in-flight footprint stays small.

    Per streamed (row, col) element we account for:
      2 * itemsize   double-buffered input block
      ~16 bytes      f32 upcast, exp(x - m), int32 col iota, select temps
    ~1-2 MiB blocks already reach ~85% of HBM roofline, so we do not chase
    huge tiles; the whole kernel stays well under 32 MiB scoped VMEM (and
    v7x's 64 MiB physical VMEM).
    """
    bytes_per_elem = 2 * itemsize + 16
    row_align = 16 if itemsize == 2 else 8          # bf16 packs (16,128)
    if rows <= max_row_tile:
        row_tile = int(rows)                        # full-extent block is legal
    else:
        row_tile = (max_row_tile // row_align) * row_align

    max_elems = stream_budget_bytes // bytes_per_elem
    vchunk = max(1, max_elems // max(row_tile, 1))
    vchunk = max(128, (vchunk // 128) * 128)        # lane-aligned chunks
    if vchunk >= vocab:
        vchunk = int(vocab)                         # single chunk, full extent
    return row_tile, vchunk


def label_smoothing_loss(logits, target, *, smoothing=0.0, padding_index=None,
                         row_tile=None, vocab_chunk=None):
    """Pallas equivalent of LabelSmoothing.forward.

    logits: [B, T, V] float (f32 or bf16), target: [B, T] int. Returns f32 loss.
    """
    bsz, seqlen, vocab = logits.shape
    rows = bsz * seqlen

    logits2d = logits.reshape(rows, vocab)               # stream native dtype
    target2d = target.reshape(rows, 1).astype(jnp.int32)
    itemsize = logits2d.dtype.itemsize

    auto_rt, auto_vc = _choose_tiles(rows, vocab, itemsize)
    row_tile = int(auto_rt if row_tile is None else row_tile)
    vocab_chunk = int(auto_vc if vocab_chunk is None else vocab_chunk)

    num_row_tiles = -(-rows // row_tile)
    num_vchunks = -(-vocab // vocab_chunk)
    ragged_vocab = (vocab % vocab_chunk) != 0

    kernel = functools.partial(
        _label_smoothing_kernel,
        smoothing=float(smoothing),
        n_classes=int(vocab),
        padding_index=None if padding_index is None else int(padding_index),
        row_tile=row_tile,
        vocab_chunk=vocab_chunk,
        total_rows=int(rows),
        ragged_vocab=bool(ragged_vocab),
    )

    # VMEM accounting *including* the f32 intermediates the kernel creates.
    block_elems = row_tile * vocab_chunk
    stream_bytes = 2 * block_elems * itemsize       # double-buffered input
    f32_tmp_bytes = 4 * block_elems * 4             # x_f32, exp, iota, select
    side_bytes = (2 + 4 + 2 * 2) * row_tile * 128 * 4   # targets/scratch/outs
    vmem_limit = int(min(
        max((stream_bytes + f32_tmp_bytes + side_bytes) * 13 // 10,
            32 * 1024 * 1024),
        40 * 1024 * 1024))                          # <= ~40 MiB fits v7x 64 MiB

    loss_part, cnt_part = pl.pallas_call(
        kernel,
        out_shape=(
            jax.ShapeDtypeStruct((num_row_tiles, 1, 1), jnp.float32),
            jax.ShapeDtypeStruct((num_row_tiles, 1, 1), jnp.float32),
        ),
        grid_spec=pltpu.PrefetchScalarGridSpec(
            num_scalar_prefetch=0,
            grid=(num_row_tiles, num_vchunks),
            in_specs=[
                pl.BlockSpec((row_tile, vocab_chunk), lambda i, j: (i, j)),
                pl.BlockSpec((row_tile, 1), lambda i, j: (i, 0)),
            ],
            out_specs=(
                pl.BlockSpec((None, 1, 1), lambda i, j: (i, 0, 0)),
                pl.BlockSpec((None, 1, 1), lambda i, j: (i, 0, 0)),
            ),
            scratch_shapes=[pltpu.VMEM((row_tile, 1), jnp.float32)] * 4,
        ),
        # TODO(synk): on v7x, use a CORE_PARALLEL leading axis (or pl.core_map)
        # to shard row tiles across the two TensorCores; plain "parallel" does
        # not change codegen, so no split axis is used here.
        compiler_params=pltpu.CompilerParams(
            dimension_semantics=("parallel", "arbitrary"),
            vmem_limit_bytes=vmem_limit,
        ),
    )(logits2d, target2d)

    loss_sum = jnp.sum(loss_part)
    if padding_index is not None:
        # NOTE: if *every* token is padding this divides by 0 (inf/nan), the
        # same hazard as the original PyTorch module.
        denom = jnp.sum(cnt_part)
    else:
        denom = jnp.float32(rows)
    return loss_sum / denom


def _reference_loss(logits, target, *, smoothing, padding_index, n_classes):
    # Pure-JAX reference mirroring the PyTorch forward.
    bsz, seqlen, _ = logits.shape
    logits = logits.astype(jnp.float32)
    smooth_val = smoothing / (n_classes - 1)
    one_hot = jax.nn.one_hot(target, n_classes, dtype=jnp.float32)
    smoothed = smooth_val * (1.0 - one_hot) + one_hot * (1.0 - smoothing)
    if padding_index is not None:
        mask = (target != padding_index)
        num = mask.sum()
        mask3 = mask[..., None].astype(jnp.float32)
    else:
        num = bsz * seqlen
        mask3 = jnp.ones_like(logits)
    logp = jax.nn.log_softmax(logits, axis=2)
    return -jnp.sum(logp * smoothed * mask3) / num


if __name__ == "__main__":
    key = jax.random.PRNGKey(0)

    # Case 1: bf16 logits, padding mask, single vocab chunk. B=2, T=8, V=128.
    B, T, V = 2, 8, 128
    smoothing, padding_index = 0.1, 0
    k1, k2, k3, key = jax.random.split(key, 4)
    logits = jax.random.normal(k1, (B, T, V), dtype=jnp.float32).astype(jnp.bfloat16)
    target = jax.random.randint(k2, (B, T), 1, V, dtype=jnp.int32)
    target = jnp.where(jax.random.bernoulli(k3, 0.25, (B, T)),
                       jnp.int32(padding_index), target)

    loss = jax.block_until_ready(
        label_smoothing_loss(logits, target, smoothing=smoothing,
                             padding_index=padding_index))
    ref = _reference_loss(logits, target, smoothing=smoothing,
                          padding_index=padding_index, n_classes=V)
    assert jnp.allclose(loss, ref, rtol=1e-4, atol=1e-4), (loss, ref)

    # Case 2: no padding index (divide by B*T).
    loss2 = jax.block_until_ready(
        label_smoothing_loss(logits, target, smoothing=smoothing,
                             padding_index=None))
    ref2 = _reference_loss(logits, target, smoothing=smoothing,
                           padding_index=None, n_classes=V)
    assert jnp.allclose(loss2, ref2, rtol=1e-4, atol=1e-4), (loss2, ref2)

    # Case 3: f32 logits, ragged row tail AND ragged vocab chunks (online LSE).
    # rows=18, row_tile=8 -> 3 row tiles; V=200, chunk=128 -> 2 chunks (ragged).
    B3, T3, V3 = 2, 9, 200
    k4, k5, k6, key = jax.random.split(key, 4)
    logits3 = jax.random.normal(k4, (B3, T3, V3), dtype=jnp.float32)
    target3 = jax.random.randint(k5, (B3, T3), 1, V3, dtype=jnp.int32)
    target3 = jnp.where(jax.random.bernoulli(k6, 0.3, (B3, T3)),
                        jnp.int32(3), target3)
    loss3 = jax.block_until_ready(
        label_smoothing_loss(logits3, target3, smoothing=0.2,
                             padding_index=3, row_tile=8, vocab_chunk=128))
    ref3 = _reference_loss(logits3, target3, smoothing=0.2,
                           padding_index=3, n_classes=V3)
    assert jnp.allclose(loss3, ref3, rtol=1e-4, atol=1e-4), (loss3, ref3)

    # Case 4: bf16 logits, non-ragged multi-chunk vocab path (V=256, chunk=128).
    B4, T4, V4 = 2, 8, 256
    k7, k8, key = jax.random.split(key, 3)
    logits4 = jax.random.normal(k7, (B4, T4, V4), dtype=jnp.float32).astype(jnp.bfloat16)
    target4 = jax.random.randint(k8, (B4, T4), 0, V4, dtype=jnp.int32)
    loss4 = jax.block_until_ready(
        label_smoothing_loss(logits4, target4, smoothing=0.1,
                             padding_index=None, vocab_chunk=128))
    ref4 = _reference_loss(logits4, target4, smoothing=0.1,
                           padding_index=None, n_classes=V4)
    assert jnp.allclose(loss4, ref4, rtol=1e-4, atol=1e-4), (loss4, ref4)

    print("KERNEL_OK")
</pallas_src>

<mosaic_0001>
module attributes {stable_mosaic.version = 11 : i64} {
  func.func @_label_smoothing_kernel(%arg0: i32, %arg1: i32, %arg2: memref<16x128xbf16, #tpu.memory_space<vmem>>, %arg3: memref<16x1xi32, #tpu.memory_space<vmem>>, %arg4: memref<1x1x1xf32, #tpu.memory_space<vmem>>, %arg5: memref<1x1x1xf32, #tpu.memory_space<vmem>>, %arg6: memref<16x1xf32, #tpu.memory_space<vmem>>, %arg7: memref<16x1xf32, #tpu.memory_space<vmem>>, %arg8: memref<16x1xf32, #tpu.memory_space<vmem>>, %arg9: memref<16x1xf32, #tpu.memory_space<vmem>>) attributes {dimension_semantics = [#tpu.dimension_semantics<parallel>, #tpu.dimension_semantics<arbitrary>], iteration_bounds = array<i64: 1, 1>, scalar_prefetch = 0 : i64, scratch_operands = 4 : i64, tpu.core_type = #tpu.core_type<tc>, window_params = [{transform_indices = @transform_0, window_bounds = array<i64: 16, 128>}, {transform_indices = @transform_1, window_bounds = array<i64: 16, 1>}, {transform_indices = @transform_2, window_bounds = array<i64: 1, 1, 1>}, {transform_indices = @transform_3, window_bounds = array<i64: 1, 1, 1>}]} {
    %c0_i32 = arith.constant 0 : i32
    %0 = arith.cmpi eq, %arg1, %c0_i32 : i32
    %1 = arith.extui %0 : i1 to i32
    %c0_i32_0 = arith.constant 0 : i32
    %2 = arith.cmpi ne, %1, %c0_i32_0 : i32
    scf.if %2 {
      %cst_28 = arith.constant 0xFF800000 : f32
      %45 = vector.broadcast %cst_28 : f32 to vector<16x1xf32>
      %c0_29 = arith.constant 0 : index
      %c0_30 = arith.constant 0 : index
      %46 = vector.load %arg6[%c0_29, %c0_30] : memref<16x1xf32, #tpu.memory_space<vmem>>, vector<16x1xf32>
      tpu.vector_store %arg6[%c0_29, %c0_30], %45 {strides = array<i32>} : memref<16x1xf32, #tpu.memory_space<vmem>>, vector<16x1xf32>,
      %cst_31 = arith.constant 0.000000e+00 : f32
      %47 = vector.broadcast %cst_31 : f32 to vector<16x1xf32>
      %c0_32 = arith.constant 0 : index
      %c0_33 = arith.constant 0 : index
      %48 = vector.load %arg7[%c0_32, %c0_33] : memref<16x1xf32, #tpu.memory_space<vmem>>, vector<16x1xf32>
      tpu.vector_store %arg7[%c0_32, %c0_33], %47 {strides = array<i32>} : memref<16x1xf32, #tpu.memory_space<vmem>>, vector<16x1xf32>,
      %cst_34 = arith.constant 0.000000e+00 : f32
      %49 = vector.broadcast %cst_34 : f32 to vector<16x1xf32>
      %c0_35 = arith.constant 0 : index
      %c0_36 = arith.constant 0 : index
      %50 = vector.load %arg8[%c0_35, %c0_36] : memref<16x1xf32, #tpu.memory_space<vmem>>, vector<16x1xf32>
      tpu.vector_store %arg8[%c0_35, %c0_36], %49 {strides = array<i32>} : memref<16x1xf32, #tpu.memory_space<vmem>>, vector<16x1xf32>,
      %cst_37 = arith.constant 0.000000e+00 : f32
      %51 = vector.broadcast %cst_37 : f32 to vector<16x1xf32>
      %c0_38 = arith.constant 0 : index
      %c0_39 = arith.constant 0 : index
      %52 = vector.load %arg9[%c0_38, %c0_39] : memref<16x1xf32, #tpu.memory_space<vmem>>, vector<16x1xf32>
      tpu.vector_store %arg9[%c0_38, %c0_39], %51 {strides = array<i32>} : memref<16x1xf32, #tpu.memory_space<vmem>>, vector<16x1xf32>,
    } else {
    }
    %c0 = arith.constant 0 : index
    %c0_1 = arith.constant 0 : index
    %3 = vector.load %arg2[%c0, %c0_1] : memref<16x128xbf16, #tpu.memory_space<vmem>>, vector<16x128xbf16>
    %c0_2 = arith.constant 0 : index
    %c0_3 = arith.constant 0 : index
    %4 = vector.load %arg3[%c0_2, %c0_3] : memref<16x1xi32, #tpu.memory_space<vmem>>, vector<16x1xi32>
    %c128_i32 = arith.constant 128 : i32
    %5 = arith.muli %arg1, %c128_i32 : i32
    %6 = tpu.iota {dimensions = array<i32: 1>} : vector<16x128xi32>
    %7 = vector.broadcast %5 : i32 to vector<16x128xi32>
    %8 = arith.addi %7, %6 : vector<16x128xi32>
    %cst = arith.constant dense<0xFF80> : vector<16xbf16>
    %9 = vector.multi_reduction <maximumf>, %3, %cst [1] : vector<16x128xbf16> to vector<16xbf16>
    %10 = vector.shape_cast %9 : vector<16xbf16> to vector<16x1xbf16>
    %11 = arith.extf %10 : vector<16x1xbf16> to vector<16x1xf32>
    %12 = arith.extf %3 : vector<16x128xbf16> to vector<16x128xf32>
    %c0_4 = arith.constant 0 : index
    %c0_5 = arith.constant 0 : index
    %13 = vector.load %arg6[%c0_4, %c0_5] : memref<16x1xf32, #tpu.memory_space<vmem>>, vector<16x1xf32>
    %14 = arith.maximumf %13, %11 : vector<16x1xf32>
    %c0_6 = arith.constant 0 : index
    %c0_7 = arith.constant 0 : index
    %15 = vector.load %arg6[%c0_6, %c0_7] : memref<16x1xf32, #tpu.memory_space<vmem>>, vector<16x1xf32>
    %16 = arith.subf %15, %14 : vector<16x1xf32>
    %17 = math.exp %16 : vector<16x1xf32>
    %18 = vector.broadcast %14 : vector<16x1xf32> to vector<16x128xf32>
    %19 = arith.subf %12, %18 : vector<16x128xf32>
    %20 = math.exp %19 : vector<16x128xf32>
    %c0_8 = arith.constant 0 : index
    %c0_9 = arith.constant 0 : index
    %21 = vector.load %arg7[%c0_8, %c0_9] : memref<16x1xf32, #tpu.memory_space<vmem>>, vector<16x1xf32>
    %22 = arith.mulf %17, %21 : vector<16x1xf32>
    %cst_10 = arith.constant dense<0.000000e+00> : vector<16xf32>
    %23 = vector.multi_reduction <add>, %20, %cst_10 [1] : vector<16x128xf32> to vector<16xf32>
    %24 = vector.shape_cast %23 : vector<16xf32> to vector<16x1xf32>
    %25 = arith.addf %22, %24 : vector<16x1xf32>
    %c0_11 = arith.constant 0 : index
    %c0_12 = arith.constant 0 : index
    %26 = vector.load %arg7[%c0_11, %c0_12] : memref<16x1xf32, #tpu.memory_space<vmem>>, vector<16x1xf32>
    tpu.vector_store %arg7[%c0_11, %c0_12], %25 {strides = array<i32>} : memref<16x1xf32, #tpu.memory_space<vmem>>, vector<16x1xf32>,
    %c0_13 = arith.constant 0 : index
    %c0_14 = arith.constant 0 : index
    %27 = vector.load %arg8[%c0_13, %c0_14] : memref<16x1xf32, #tpu.memory_space<vmem>>, vector<16x1xf32>
    %cst_15 = arith.constant dense<0.000000e+00> : vector<16xf32>
    %28 = vector.multi_reduction <add>, %12, %cst_15 [1] : vector<16x128xf32> to vector<16xf32>
    %29 = vector.shape_cast %28 : vector<16xf32> to vector<16x1xf32>
    %30 = arith.addf %27, %29 : vector<16x1xf32>
    %c0_16 = arith.constant 0 : index
    %c0_17 = arith.constant 0 : index
    %31 = vector.load %arg8[%c0_16, %c0_17] : memref<16x1xf32, #tpu.memory_space<vmem>>, vector<16x1xf32>
    tpu.vector_store %arg8[%c0_16, %c0_17], %30 {strides = array<i32>} : memref<16x1xf32, #tpu.memory_space<vmem>>, vector<16x1xf32>,
    %c0_18 = arith.constant 0 : index
    %c0_19 = arith.constant 0 : index
    %32 = vector.load %arg9[%c0_18, %c0_19] : memref<16x1xf32, #tpu.memory_space<vmem>>, vector<16x1xf32>
    %33 = vector.broadcast %4 : vector<16x1xi32> to vector<16x128xi32>
    %34 = arith.cmpi eq, %8, %33 : vector<16x128xi32>
    %cst_20 = arith.constant 0.000000e+00 : f32
    %35 = vector.broadcast %cst_20 : f32 to vector<16x128xf32>
    %36 = arith.select %34, %12, %35 : vector<16x128xi1>, vector<16x128xf32>
    %cst_21 = arith.constant dense<0.000000e+00> : vector<16xf32>
    %37 = vector.multi_reduction <add>, %36, %cst_21 [1] : vector<16x128xf32> to vector<16xf32>
    %38 = vector.shape_cast %37 : vector<16xf32> to vector<16x1xf32>
    %39 = arith.addf %32, %38 : vector<16x1xf32>
    %c0_22 = arith.constant 0 : index
    %c0_23 = arith.constant 0 : index
    %40 = vector.load %arg9[%c0_22, %c0_23] : memref<16x1xf32, #tpu.memory_space<vmem>>, vector<16x1xf32>
    tpu.vector_store %arg9[%c0_22, %c0_23], %39 {strides = array<i32>} : memref<16x1xf32, #tpu.memory_space<vmem>>, vector<16x1xf32>,
    %c0_24 = arith.constant 0 : index
    %c0_25 = arith.constant 0 : index
    %41 = vector.load %arg6[%c0_24, %c0_25] : memref<16x1xf32, #tpu.memory_space<vmem>>, vector<16x1xf32>
    tpu.vector_store %arg6[%c0_24, %c0_25], %14 {strides = array<i32>} : memref<16x1xf32, #tpu.memory_space<vmem>>, vector<16x1xf32>,
    %c0_i32_26 = arith.constant 0 : i32
    %42 = arith.cmpi eq, %arg1, %c0_i32_26 : i32
    %43 = arith.extui %42 : i1 to i32
    %c0_i32_27 = arith.constant 0 : i32
    %44 = arith.cmpi ne, %43, %c0_i32_27 : i32
    scf.if %44 {
      %c0_28 = arith.constant 0 : index
      %c0_29 = arith.constant 0 : index
      %45 = vector.load %arg6[%c0_28, %c0_29] : memref<16x1xf32, #tpu.memory_space<vmem>>, vector<16x1xf32>
      %c0_30 = arith.constant 0 : index
      %c0_31 = arith.constant 0 : index
      %46 = vector.load %arg7[%c0_30, %c0_31] : memref<16x1xf32, #tpu.memory_space<vmem>>, vector<16x1xf32>
      %47 = math.log %46 : vector<16x1xf32>
      %48 = arith.addf %45, %47 : vector<16x1xf32>
      %c0_32 = arith.constant 0 : index
      %c0_33 = arith.constant 0 : index
      %49 = vector.load %arg8[%c0_32, %c0_33] : memref<16x1xf32, #tpu.memory_space<vmem>>, vector<16x1xf32>
      %cst_34 = arith.constant 1.280000e+02 : f32
      %50 = vector.broadcast %cst_34 : f32 to vector<16x1xf32>
      %51 = arith.mulf %50, %48 : vector<16x1xf32>
      %52 = arith.subf %49, %51 : vector<16x1xf32>
      %c0_35 = arith.constant 0 : index
      %c0_36 = arith.constant 0 : index
      %53 = vector.load %arg9[%c0_35, %c0_36] : memref<16x1xf32, #tpu.memory_space<vmem>>, vector<16x1xf32>
      %54 = arith.subf %53, %48 : vector<16x1xf32>
      %cst_37 = arith.constant 7.87401571E-4 : f32
      %55 = vector.broadcast %cst_37 : f32 to vector<16x1xf32>
      %56 = arith.mulf %55, %52 : vector<16x1xf32>
      %cst_38 = arith.constant 0.899212599 : f32
      %57 = vector.broadcast %cst_38 : f32 to vector<16x1xf32>
      %58 = arith.mulf %57, %54 : vector<16x1xf32>
      %59 = arith.addf %56, %58 : vector<16x1xf32>
      %cst_39 = arith.constant 0.000000e+00 : f32
      %60 = vector.broadcast %cst_39 : f32 to vector<16x1xf32>
      %61 = arith.subf %60, %59 : vector<16x1xf32>
      %c16_i32 = arith.constant 16 : i32
      %62 = arith.muli %arg0, %c16_i32 : i32
      %63 = tpu.iota {dimensions = array<i32: 0>} : vector<16x1xi32>
      %64 = vector.broadcast %62 : i32 to vector<16x1xi32>
      %65 = arith.addi %64, %63 : vector<16x1xi32>
      %c16_i32_40 = arith.constant 16 : i32
      %66 = vector.broadcast %c16_i32_40 : i32 to vector<16x1xi32>
      %67 = arith.cmpi slt, %65, %66 : vector<16x1xi32>
      %c0_i32_41 = arith.constant 0 : i32
      %68 = vector.broadcast %c0_i32_41 : i32 to vector<16x1xi32>
      %69 = arith.cmpi ne, %4, %68 : vector<16x1xi32>
      %70 = arith.andi %67, %69 : vector<16x1xi1>
      %cst_42 = arith.constant 0.000000e+00 : f32
      %71 = vector.broadcast %cst_42 : f32 to vector<16x1xf32>
      %72 = arith.select %70, %61, %71 : vector<16x1xi1>, vector<16x1xf32>
      %cst_43 = arith.constant dense<0.000000e+00> : vector<1xf32>
      %73 = vector.multi_reduction <add>, %72, %cst_43 [0] : vector<16x1xf32> to vector<1xf32>
      %74 = vector.shape_cast %73 : vector<1xf32> to vector<1x1xf32>
      %c0_44 = arith.constant 0 : index
      %c0_45 = arith.constant 0 : index
      %c0_46 = arith.constant 0 : index
      %75 = vector.load %arg4[%c0_44, %c0_45, %c0_46] : memref<1x1x1xf32, #tpu.memory_space<vmem>>, vector<1x1x1xf32>
      %76 = vector.shape_cast %75 : vector<1x1x1xf32> to vector<1x1xf32>
      %77 = vector.shape_cast %74 : vector<1x1xf32> to vector<1x1x1xf32>
      tpu.vector_store %arg4[%c0_44, %c0_45, %c0_46], %77 {strides = array<i32>} : memref<1x1x1xf32, #tpu.memory_space<vmem>>, vector<1x1x1xf32>,
      %78 = arith.extui %70 : vector<16x1xi1> to vector<16x1xi32>
      %79 = arith.sitofp %78 : vector<16x1xi32> to vector<16x1xf32>
      %cst_47 = arith.constant dense<0.000000e+00> : vector<1xf32>
      %80 = vector.multi_reduction <add>, %79, %cst_47 [0] : vector<16x1xf32> to vector<1xf32>
      %81 = vector.shape_cast %80 : vector<1xf32> to vector<1x1xf32>
      %c0_48 = arith.constant 0 : index
      %c0_49 = arith.constant 0 : index
      %c0_50 = arith.constant 0 : index
      %82 = vector.load %arg5[%c0_48, %c0_49, %c0_50] : memref<1x1x1xf32, #tpu.memory_space<vmem>>, vector<1x1x1xf32>
      %83 = vector.shape_cast %82 : vector<1x1x1xf32> to vector<1x1xf32>
      %84 = vector.shape_cast %81 : vector<1x1xf32> to vector<1x1x1xf32>
      tpu.vector_store %arg5[%c0_48, %c0_49, %c0_50], %84 {strides = array<i32>} : memref<1x1x1xf32, #tpu.memory_space<vmem>>, vector<1x1x1xf32>,
    } else {
    }
    return
  }
  func.func @transform_0(%arg0: i32, %arg1: i32) -> (i32, i32) {
    %c0_i32 = arith.constant 0 : i32
    return %arg0, %arg1 : i32, i32
  }
  func.func @transform_1(%arg0: i32, %arg1: i32) -> (i32, i32) {
    %c0_i32 = arith.constant 0 : i32
    %c0_i32_0 = arith.constant 0 : i32
    return %arg0, %c0_i32 : i32, i32
  }
  func.func @transform_2(%arg0: i32, %arg1: i32) -> (i32, i32, i32) {
    %c0_i32 = arith.constant 0 : i32
    %c0_i32_0 = arith.constant 0 : i32
    %c0_i32_1 = arith.constant 0 : i32
    return %arg0, %c0_i32, %c0_i32_0 : i32, i32, i32
  }
  func.func @transform_3(%arg0: i32, %arg1: i32) -> (i32, i32, i32) {
    %c0_i32 = arith.constant 0 : i32
    %c0_i32_0 = arith.constant 0 : i32
    %c0_i32_1 = arith.constant 0 : i32
    return %arg0, %c0_i32, %c0_i32_0 : i32, i32, i32
  }
}

</mosaic_0001>

<llo_original>
// kernel: tpu_custom_call.1
$region0: #{tpu_custom_call.1}
  #allocation0 [shape = 'u32[]', space=smem, size = 0x4, offset = 0x4, fixed_abs, tag = 'smem constant byte address 0x4 - core index']
  #allocation1 [shape = 'u32[144,128]{1,0:T(1,128)}', space=vmem, size = 0x12000, scoped, tag = 'internal scratch']
  #allocation2 [shape = 'f32[16,1]{1,0:T(8,128)}', space=vmem, size = 0x2000, scoped, tag = 'scratch operand']
  #allocation3 [shape = 'f32[16,1]{1,0:T(8,128)}', space=vmem, size = 0x2000, scoped, tag = 'scratch operand']
  #allocation4 [shape = 'f32[16,1]{1,0:T(8,128)}', space=vmem, size = 0x2000, scoped, tag = 'scratch operand']
  #allocation5 [shape = 'f32[16,1]{1,0:T(8,128)}', space=vmem, size = 0x2000, scoped, tag = 'scratch operand']
  %s0 = inlined_call_operand.vmem [shape: bf16[16,128], index: 0, kind: input, shape index: {}]
  %s1 = inlined_call_operand.vmem [shape: s32[16,1], index: 1, kind: input, shape index: {}]
  %s2 = inlined_call_operand.hbm [shape: f32[1,1,1], index: 2, kind: output, shape index: {0}]
  %s3 = inlined_call_operand.hbm [shape: f32[1,1,1], index: 3, kind: output, shape index: {1}]
  %4 = xla_tuple %s2, %s3
  %s5 = sld [smem:[#allocation0]]
  $region34: #{tpu_custom_call.1} parent=0
    _
  %s7 = ssub.s32 1, %s5
  %s8 = scalar_select 0, %s7, %s5
  $region1: #{tpu_custom_call.1} parent=0
    #allocation6 [shape = 'u8[512]{0}', space=vmem, size = 0x400, scoped, tag = 'output window, operand 0, single buffered']
    #allocation7 [shape = 's32[1]{0}', space=sflag, size = 0x4, scoped, tag = 'scoped memory for tpu_custom_call.1']
    #allocation8 [shape = 'u8[512]{0}', space=vmem, size = 0x400, scoped, tag = 'output window, operand 1, single buffered']
    #allocation9 [shape = 's32[1]{0}', space=sflag, size = 0x4, scoped, tag = 'scoped memory for tpu_custom_call.1']
    %9 = vsyncpa [#allocation7], 0
    %10 = vsyncpa [#allocation9], 0
    // Predicated region
    $region2: #{tpu_custom_call.1} parent=1 // pred_check
      _
    $region3: #{tpu_custom_call.1} parent=1 // pred_check_branch
      %12 = sbr.rel (0) target = $region5
    $region4: #{tpu_custom_call.1} parent=1 // pred_region
      _
    $region5: #{tpu_custom_call.1} parent=1 // pred_fallthru
      _
    // Predicated region
    $region6: #{tpu_custom_call.1} parent=1 // pred_check
      _
    $region7: #{tpu_custom_call.1} parent=1 // pred_check_branch
      %14 = sbr.rel (0) target = $region9
    $region8: #{tpu_custom_call.1} parent=1 // pred_region
      _
    $region9: #{tpu_custom_call.1} parent=1 // pred_fallthru
      _
    %p15 = scmp.eq.s32.totalorder 0, 0
    // Predicated region
    $region10: #{tpu_custom_call.1} parent=1 // pred_check
      %p16 = pneg %p15
    $region11: #{tpu_custom_call.1} parent=1 // pred_check_branch
      %18 = sbr.rel (%p16) target = $region13
    $region12: #{tpu_custom_call.1} parent=1 // pred_region
      %vm19 = vcmask 7168
      %20 = vst.msk [vmem:[#allocation2] sm:$0xff] %vm19, -inf
      %21 = vst.msk [vmem:[#allocation2 + $0x8] sm:$0xff] %vm19, -inf
      %22 = vst.msk [vmem:[#allocation3] sm:$0xff] %vm19, 0.0
      %23 = vst.msk [vmem:[#allocation3 + $0x8] sm:$0xff] %vm19, 0.0
      %24 = vst.msk [vmem:[#allocation4] sm:$0xff] %vm19, 0.0
      %25 = vst.msk [vmem:[#allocation4 + $0x8] sm:$0xff] %vm19, 0.0
      %26 = vst.msk [vmem:[#allocation5] sm:$0xff] %vm19, 0.0
      %27 = vst.msk [vmem:[#allocation5 + $0x8] sm:$0xff] %vm19, 0.0
    $region13: #{tpu_custom_call.1} parent=1 // pred_fallthru
      _
    %v28 = vld [vmem:[%s0] sm:$0xf]
    %v29 = vld [vmem:[%s0 + $0x4] sm:$0xf]
    %v30 = vld [vmem:[%s1] sm:$0xff]
    %v31 = vld [vmem:[%s1 + $0x8] sm:$0xff]
    %s32 = smul.u32 0, 128
    %v33 = vlaneseq
    %v34 = vand.u32 %v33, 127
    %v35 = vstv %s32
    %v36 = vadd.s32 %v35, %v34
    %v39 = vunpack.c.l.b16 %v28
    %v40 = vunpack.c.l.b16 %v29
    %v41 = vpack.c.b16 %v40, %v39
    %43 = vmax.xlane.bf16.xlu0 %v41
    %v44 = vpop.xlane.xlu0 %43
    %v45 = vunpack.c.l.bf16 %v44
    %v46 = vunpack.c.h.bf16 %v44
    %v47 = vunpack.c.l.bf16 %v28
    %v48 = vunpack.c.l.bf16 %v29
    %v49 = vld [vmem:[#allocation2] sm:$0xff]
    %v50 = vld [vmem:[#allocation2 + $0x8] sm:$0xff]
    %v51 = vmax.f32 %v49, %v45
    %v52 = vmax.f32 %v50, %v46
    %v53 = vsub.f32 %v49, %v51
    %v54 = vsub.f32 %v50, %v52
    %v55 = vmul.f32 %v53, 1.442695
    %v56 = vpow.pop %v55
    %v57 = vmul.f32 %v54, 1.442695
    %v58 = vpow.pop %v57
    %60 = vset.pattern.permute.xlu0 0
    %61 = vperm.xlu0 %60, %v51
    %v62 = vpop.permute.xlu0 %61
    %65 = vset.pattern.permute.xlu0 0
    %66 = vperm.xlu0 %65, %v52
    %v67 = vpop.permute.xlu0 %66
    %v69 = vsub.f32 %v47, %v62
    %v70 = vsub.f32 %v48, %v67
    %v71 = vmul.f32 %v69, 1.442695
    %v72 = vpow.pop %v71
    %v73 = vmul.f32 %v70, 1.442695
    %v74 = vpow.pop %v73
    %v75 = vld [vmem:[#allocation3] sm:$0xff]
    %v76 = vld [vmem:[#allocation3 + $0x8] sm:$0xff]
    %v77 = vmul.f32 %v56, %v75
    %v78 = vmul.f32 %v58, %v76
    %79 = vadd.xlane.f32.xlu0 %v72
    %v80 = vpop.xlane.xlu0 %79
    %81 = vadd.xlane.f32.xlu0 %v74
    %v82 = vpop.xlane.xlu0 %81
    %v83 = vadd.f32 %v77, %v80
    %v84 = vadd.f32 %v78, %v82
    %vm85 = vcmask 7168
    %86 = vst.msk [vmem:[#allocation3] sm:$0xff] %vm85, %v83
    %87 = vst.msk [vmem:[#allocation3 + $0x8] sm:$0xff] %vm85, %v84
    %v88 = vld [vmem:[#allocation4] sm:$0xff]
    %v89 = vld [vmem:[#allocation4 + $0x8] sm:$0xff]
    %90 = vadd.xlane.f32.xlu0 %v47
    %v91 = vpop.xlane.xlu0 %90
    %92 = vadd.xlane.f32.xlu0 %v48
    %v93 = vpop.xlane.xlu0 %92
    %v94 = vadd.f32 %v88, %v91
    %v95 = vadd.f32 %v89, %v93
    %96 = vst.msk [vmem:[#allocation4] sm:$0xff] %vm85, %v94
    %97 = vst.msk [vmem:[#allocation4 + $0x8] sm:$0xff] %vm85, %v95
    %v98 = vld [vmem:[#allocation5] sm:$0xff]
    %v99 = vld [vmem:[#allocation5 + $0x8] sm:$0xff]
    %100 = vset.pattern.permute.xlu0 0
    %101 = vperm.xlu0 %100, %v30
    %v102 = vpop.permute.xlu0 %101
    %103 = vset.pattern.permute.xlu0 0
    %104 = vperm.xlu0 %103, %v31
    %v105 = vpop.permute.xlu0 %104
    %vm106 = vcmp.eq.s32.totalorder %v36, %v102
    %vm107 = vcmp.eq.s32.totalorder %v36, %v105
    %v108 = vsel %vm106, %v47, 0.0
    %v109 = vsel %vm107, %v48, 0.0
    %110 = vadd.xlane.f32.xlu0 %v108
    %v111 = vpop.xlane.xlu0 %110
    %112 = vadd.xlane.f32.xlu0 %v109
    %v113 = vpop.xlane.xlu0 %112
    %v114 = vadd.f32 %v98, %v111
    %v115 = vadd.f32 %v99, %v113
    %116 = vst.msk [vmem:[#allocation5] sm:$0xff] %vm85, %v114
    %117 = vst.msk [vmem:[#allocation5 + $0x8] sm:$0xff] %vm85, %v115
    %118 = vst.msk [vmem:[#allocation2] sm:$0xff] %vm85, %v51
    %119 = vst.msk [vmem:[#allocation2 + $0x8] sm:$0xff] %vm85, %v52
    // Predicated region
    $region14: #{tpu_custom_call.1} parent=1 // pred_check
      %p120 = pneg %p15
    $region15: #{tpu_custom_call.1} parent=1 // pred_check_branch
      %122 = sbr.rel (%p120) target = $region17
    $region16: #{tpu_custom_call.1} parent=1 // pred_region
      %v123 = vld [vmem:[#allocation2] sm:$0xff]
      %v124 = vld [vmem:[#allocation2 + $0x8] sm:$0xff]
      %v125 = vld [vmem:[#allocation3] sm:$0xff]
      %v126 = vld [vmem:[#allocation3 + $0x8] sm:$0xff]
      %v127 = vlog2.pop %v125
      %v128 = vmul.f32 %v127, 0.6931472
      %v129 = vlog2.pop %v126
      %v130 = vmul.f32 %v129, 0.6931472
      %v131 = vadd.f32 %v123, %v128
      %v132 = vadd.f32 %v124, %v130
      %v133 = vld [vmem:[#allocation4] sm:$0xff]
      %v134 = vld [vmem:[#allocation4 + $0x8] sm:$0xff]
      %v135 = vmul.f32 %v131, 128.0
      %v136 = vmul.f32 %v132, 128.0
      %v137 = vsub.f32 %v133, %v135
      %v138 = vsub.f32 %v134, %v136
      %v139 = vld [vmem:[#allocation5] sm:$0xff]
      %v140 = vld [vmem:[#allocation5 + $0x8] sm:$0xff]
      %v141 = vsub.f32 %v139, %v131
      %v142 = vsub.f32 %v140, %v132
      %v143 = vmul.f32 %v137, 0.0007874016
      %v144 = vmul.f32 %v138, 0.0007874016
      %v145 = vmul.f32 %v141, 0.8992126
      %v146 = vmul.f32 %v142, 0.8992126
      %v147 = vadd.f32 %v143, %v145
      %v148 = vadd.f32 %v144, %v146
      %v149 = vsub.f32 0.0, %v147
      %v150 = vsub.f32 0.0, %v148
      %s151 = smul.u32 0, 16
      %v152 = vlaneseq
      %v153 = vshrl.u32 %v152, 7
      %v154 = vadd.s32 %v153, 8
      %v155 = vstv %s151
      %v156 = vadd.s32 %v155, %v153
      %v157 = vadd.s32 %v155, %v154
      %vm158 = vcmp.lt.s32.totalorder %v156, 16
      %vm159 = vcmp.lt.s32.totalorder %v157, 16
      %vm160 = vcmp.ne.s32.totalorder %v30, 0
      %vm161 = vcmp.ne.s32.totalorder %v31, 0
      %vm162 = vmand %vm158, %vm160
      %vm163 = vmand %vm159, %vm161
      %v164 = vsel %vm162, %v149, 0.0
      %v165 = vsel %vm163, %v150, 0.0
      %v166 = vsel %vm85, %v164, 0.0
      %v167 = vsel %vm85, %v165, 0.0
      %v168 = vadd.f32 %v166, %v167
      %v169 = vrot.slane %v168, 4
      %v170 = vadd.f32 %v168, %v169
      %v171 = vrot.slane %v170, 2
      %v172 = vadd.f32 %v170, %v171
      %v173 = vrot.slane %v172, 1
      %v174 = vadd.f32 %v172, %v173
      %vm175 = vcmask 0
      %176 = vst.msk [vmem:[#allocation6] sm:$0x1] %vm175, %v174
      %v177 = vsel %vm162, 1, 0
      %v178 = vsel %vm163, 1, 0
      %v179 = vcvt.s32.f32 %v177
      %v180 = vcvt.s32.f32 %v178
      %v181 = vsel %vm85, %v179, 0.0
      %v182 = vsel %vm85, %v180, 0.0
      %v183 = vadd.f32 %v181, %v182
      %v184 = vrot.slane %v183, 4
      %v185 = vadd.f32 %v183, %v184
      %v186 = vrot.slane %v185, 2
      %v187 = vadd.f32 %v185, %v186
      %v188 = vrot.slane %v187, 1
      %v189 = vadd.f32 %v187, %v188
      %190 = vst.msk [vmem:[#allocation8] sm:$0x1] %vm175, %v189
    $region17: #{tpu_custom_call.1} parent=1 // pred_fallthru
      _
    // Predicated region
    $region18: #{tpu_custom_call.1} parent=1 // pred_check
      _
    $region19: #{tpu_custom_call.1} parent=1 // pred_check_branch
      %192 = sbr.rel (0) target = $region21
    $region20: #{tpu_custom_call.1} parent=1 // pred_region
      %s194 = ssub.s32 16, 16
      %195 = vsyncadd [#allocation7], %s194
      %s197 = sshll.u32 [#allocation6], 4
      %s198 = int_to_ptr.vmem [resolvable:$true] %s197
      %200 = dma.vmem_to_hbm [thread:$0]  %s198, 16, %s2, [#allocation7]
    $region21: #{tpu_custom_call.1} parent=1 // pred_fallthru
      _
    // Predicated region
    $region22: #{tpu_custom_call.1} parent=1 // pred_check
      _
    $region23: #{tpu_custom_call.1} parent=1 // pred_check_branch
      %202 = sbr.rel (0) target = $region25
    $region24: #{tpu_custom_call.1} parent=1 // pred_region
      %s204 = ssub.s32 16, 16
      %205 = vsyncadd [#allocation9], %s204
      %s207 = sshll.u32 [#allocation8], 4
      %s208 = int_to_ptr.vmem [resolvable:$true] %s207
      %210 = dma.vmem_to_hbm [thread:$0]  %s208, 16, %s3, [#allocation9]
    $region25: #{tpu_custom_call.1} parent=1 // pred_fallthru
      _
    // Predicated region
    $region26: #{tpu_custom_call.1} parent=1 // pred_check
      _
    $region27: #{tpu_custom_call.1} parent=1 // pred_check_branch
      %212 = sbr.rel (0) target = $region29
    $region28: #{tpu_custom_call.1} parent=1 // pred_region
      %213 = dma.done [#allocation7], 16
    $region29: #{tpu_custom_call.1} parent=1 // pred_fallthru
      _
    // Predicated region
    $region30: #{tpu_custom_call.1} parent=1 // pred_check
      _
    $region31: #{tpu_custom_call.1} parent=1 // pred_check_branch
      %215 = sbr.rel (0) target = $region33
    $region32: #{tpu_custom_call.1} parent=1 // pred_region
      %216 = dma.done [#allocation9], 16
    $region33: #{tpu_custom_call.1} parent=1 // pred_fallthru
      _
    %217 = vsyncpa [#allocation7], 1
    %218 = vsyncpa [#allocation9], 1

</llo_original>
